<compile_context>
chip_gen: v5e
topology: v5e:2x2
jax: 0.10.0
libtpu: 0.0.40
codegen_flags: <defaults>
</compile_context>

<pallas_src>
import functools

import jax
import jax.numpy as jnp
from jax.experimental import pallas as pl
from jax.experimental.pallas import tpu as pltpu


def _round_up(n: int, m: int) -> int:
    return (n + m - 1) // m * m


def _make_kernel(fc_count: int, compute_dtype):
    """Fused packed-MLP kernel for a fixed (static) number of hidden layers."""
    cd = jnp.dtype(compute_dtype)

    def kernel(x_ref, w1_ref, b1_ref, wh_ref, bh_ref, w2_ref, b2_ref, out_ref):
        # lin1 + ReLU.  MXU operands in `cd` (bf16 by default); accumulation,
        # bias add and ReLU stay f32 (v5e has no bf16 VPU path).
        h = jnp.dot(x_ref[...].astype(cd), w1_ref[...],
                    preferred_element_type=jnp.float32)
        h = jnp.maximum(h + b1_ref[...], 0.0)

        # Hidden Linear(D, D) + ReLU layers, statically unrolled.  (Switch to
        # lax.fori_loop(..., unroll=True) with a dynamic wh index only if
        # fc_count grows past ~4 and vreg live ranges blow up.)
        for i in range(fc_count):
            h = jnp.dot(h.astype(cd), wh_ref[i],
                        preferred_element_type=jnp.float32)
            h = jnp.maximum(h + bh_ref[i], 0.0)

        # lin2: Linear(D, 1) on the packed layout -> one small MXU matmul
        # against the (P*D, P) block-column matrix.  Row r / col p is the
        # scalar output of packed sample r*P + p.
        y = jnp.dot(h.astype(cd), w2_ref[...],
                    preferred_element_type=jnp.float32) + b2_ref[0]
        out_ref[...] = y.astype(out_ref.dtype)

    return kernel


def _pick_rows_tile(rows_total: int, target_rows: int):
    """Choose (rows_tile, rows_padded) for the packed-row grid.

    Prefers tiles that divide rows_total exactly (so the wrapper never has to
    jnp.pad x), keeps tiles multiple-of-8 (sublane granule), and guarantees at
    least 2 grid steps for large batches (v7x megacore sharding).
    """
    if rows_total <= 8:
        return 8, 8                                    # tiny batch: one safe tile
    if rows_total <= target_rows:
        if rows_total >= 256:
            # Enough work for both v7x TensorCores -> force >= 2 grid steps.
            tile = _round_up(-(-rows_total // 2), 8)
        else:
            tile = _round_up(rows_total, 8)
        return tile, _round_up(rows_total, tile)
    # Large batch: search for a multiple-of-8 tile near the target that
    # divides rows_total exactly (no padding pass over x).
    hi = (min(target_rows, rows_total) // 8) * 8
    lo = max(8, hi // 4)
    for cand in range(hi, lo - 1, -8):
        if rows_total % cand == 0:
            return cand, rows_total
    return hi, _round_up(rows_total, hi)


def soap_mlp_forward(x, params, *, fc_count: int,
                     compute_dtype=jnp.bfloat16, block_batch: int = 8192):
    """Fused SoapMLP forward pass.

    x:      (B, F) float32
    params: dict with w1 (F, D), b1 (1, D), wh (fc_count, D, D),
            bh (fc_count, 1, D), w2 (D, 1), b2 (1, 1)
    returns (B,) float32  (mirrors PyTorch's `out.view(-1)`; the
            `out.shape[1] != 1` branch is unreachable since lin2 has
            out_features == 1)
    """
    B, F = x.shape
    D = params["w1"].shape[1]

    # Sample-packing factor: P samples share one 128-lane row when the feature
    # and hidden widths fit (F = D = 32 -> P = 4).  P = 1 is a clean fallback.
    if 0 < F <= 128 and 0 < D <= 128:
        P = max(1, min(128 // F, 128 // D))
    else:
        P = 1

    rows_total = -(-B // P)                         # packed rows needed
    target_rows = max(8, block_batch // P)
    rows_tile, rows_padded = _pick_rows_tile(rows_total, target_rows)

    Bp = rows_padded * P
    if Bp != B:
        # Only hit for ragged / tiny batches; padded rows are sliced off below.
        x = jnp.pad(x, ((0, Bp - B), (0, 0)))
    # Free, layout-preserving reshape: P consecutive samples per packed row.
    x_packed = x.reshape(rows_padded, P * F)

    cd = jnp.dtype(compute_dtype)
    f32 = jnp.float32
    eye = jnp.eye(P, dtype=f32)
    # Block-diagonal weights keep the P packed samples independent; biases are
    # lane-tiled.  Tiny one-time prep (a few hundred KiB at D=32).
    w1b = jnp.kron(eye, params["w1"].astype(f32)).astype(cd)            # (P*F, P*D)
    whb = jax.vmap(lambda w: jnp.kron(eye, w))(
        params["wh"].astype(f32)).astype(cd)                            # (fc, P*D, P*D)
    b1b = jnp.tile(params["b1"].astype(f32), (1, P))                    # (1, P*D)
    bhb = jnp.tile(params["bh"].astype(f32), (1, 1, P))                 # (fc, 1, P*D)
    w2b = jnp.kron(eye, params["w2"].astype(f32)).astype(cd)            # (P*D, P)
    b2 = params["b2"].reshape(1).astype(f32)                            # scalar -> SMEM

    kernel = _make_kernel(fc_count, cd)
    grid = (rows_padded // rows_tile,)

    out = pl.pallas_call(
        kernel,
        out_shape=jax.ShapeDtypeStruct((rows_padded, P), jnp.float32),
        grid=grid,
        in_specs=[
            pl.BlockSpec((rows_tile, P * F), lambda i: (i, 0)),          # packed x tiles
            pl.BlockSpec((P * F, P * D), lambda i: (0, 0)),              # w1 (resident)
            pl.BlockSpec((1, P * D), lambda i: (0, 0)),                  # b1 (resident)
            pl.BlockSpec((fc_count, P * D, P * D), lambda i: (0, 0, 0)), # wh (resident)
            pl.BlockSpec((fc_count, 1, P * D), lambda i: (0, 0, 0)),     # bh (resident)
            pl.BlockSpec((P * D, P), lambda i: (0, 0)),                  # w2 block-cols
            pl.BlockSpec(memory_space=pltpu.MemorySpace.SMEM),           # b2 scalar
        ],
        out_specs=pl.BlockSpec((rows_tile, P), lambda i: (i, 0)),
        compiler_params=pltpu.CompilerParams(
            dimension_semantics=("parallel",),      # megacore sharding on v7x
            vmem_limit_bytes=32 * 1024 * 1024,      # explicit for v5e's 16 MiB default
        ),
    )(x_packed, w1b, b1b, whb, bhb, w2b, b2)

    # Packed row r, segment p  ->  sample r*P + p, so reshape(-1) is exact.
    return out.reshape(-1)[:B]


def init_params(key, in_features: int, dim1: int, fc_count: int):
    """Deterministic PyTorch-Linear-style init (uniform +-1/sqrt(fan_in))."""
    ks = jax.random.split(key, 6)

    def u(k, shape, fan_in):
        bound = 1.0 / jnp.sqrt(jnp.asarray(fan_in, jnp.float32))
        return jax.random.uniform(k, shape, jnp.float32, -bound, bound)

    return {
        "w1": u(ks[0], (in_features, dim1), in_features),
        "b1": u(ks[1], (1, dim1), in_features),
        "wh": u(ks[2], (fc_count, dim1, dim1), dim1),
        "bh": u(ks[3], (fc_count, 1, dim1), dim1),
        "w2": u(ks[4], (dim1, 1), dim1),
        "b2": u(ks[5], (1, 1), dim1),
    }


def soap_mlp_reference(x, params, *, fc_count: int, compute_dtype=jnp.float32):
    """Pure-JAX reference applying the same operand casts as the kernel."""
    cd = jnp.dtype(compute_dtype)
    h = jnp.dot(x.astype(cd), params["w1"].astype(cd),
                preferred_element_type=jnp.float32)
    h = jnp.maximum(h + params["b1"], 0.0)
    for i in range(fc_count):
        h = jnp.dot(h.astype(cd), params["wh"][i].astype(cd),
                    preferred_element_type=jnp.float32)
        h = jnp.maximum(h + params["bh"][i], 0.0)
    out = jnp.dot(h.astype(cd), params["w2"].astype(cd),
                  preferred_element_type=jnp.float32) + params["b2"]
    return out.reshape(-1)


if __name__ == "__main__":
    batch = 8
    in_features = 32   # data.shape[2] in the PyTorch module
    dim1 = 32
    fc_count = 2

    key = jax.random.PRNGKey(0)
    k_x, k_p = jax.random.split(key)
    x = jax.random.normal(k_x, (batch, in_features), jnp.float32)
    params = init_params(k_p, in_features, dim1, fc_count)

    # f32-operand path: tight correctness check against the pure-JAX reference.
    run_f32 = jax.jit(functools.partial(
        soap_mlp_forward, fc_count=fc_count, compute_dtype=jnp.float32))
    y = jax.block_until_ready(run_f32(x, params))
    y_ref = soap_mlp_reference(x, params, fc_count=fc_count)
    assert y.shape == (batch,)
    assert jnp.allclose(y, y_ref, atol=1e-4, rtol=1e-4), (y, y_ref)

    # Default path: bf16 MXU operands (MXU-native on all gens), f32 accumulation.
    run_bf16 = jax.jit(functools.partial(soap_mlp_forward, fc_count=fc_count))
    y16 = jax.block_until_ready(run_bf16(x, params))
    y16_ref = soap_mlp_reference(x, params, fc_count=fc_count,
                                 compute_dtype=jnp.bfloat16)
    assert y16.shape == (batch,)
    assert jnp.allclose(y16, y16_ref, atol=5e-2, rtol=5e-2), (y16, y16_ref)

    print("KERNEL_OK")
</pallas_src>

<mosaic_0001>
module attributes {stable_mosaic.version = 11 : i64} {
  func.func @kernel(%arg0: i32, %arg1: memref<8x128xf32, #tpu.memory_space<vmem>>, %arg2: memref<128x128xf32, #tpu.memory_space<vmem>>, %arg3: memref<1x128xf32, #tpu.memory_space<vmem>>, %arg4: memref<2x128x128xf32, #tpu.memory_space<vmem>>, %arg5: memref<2x1x128xf32, #tpu.memory_space<vmem>>, %arg6: memref<128x4xf32, #tpu.memory_space<vmem>>, %arg7: memref<1xf32, #tpu.memory_space<smem>>, %arg8: memref<8x4xf32, #tpu.memory_space<vmem>>) attributes {dimension_semantics = [#tpu.dimension_semantics<parallel>], iteration_bounds = array<i64: 1>, scalar_prefetch = 0 : i64, scratch_operands = 0 : i64, tpu.core_type = #tpu.core_type<tc>, window_params = [{transform_indices = @transform_0, window_bounds = array<i64: 8, 128>}, {pipeline_mode = #tpu.pipeline_mode<synchronous>, transform_indices = @transform_1, window_bounds = array<i64: 128, 128>}, {pipeline_mode = #tpu.pipeline_mode<synchronous>, transform_indices = @transform_2, window_bounds = array<i64: 1, 128>}, {pipeline_mode = #tpu.pipeline_mode<synchronous>, transform_indices = @transform_3, window_bounds = array<i64: 2, 128, 128>}, {pipeline_mode = #tpu.pipeline_mode<synchronous>, transform_indices = @transform_4, window_bounds = array<i64: 2, 1, 128>}, {pipeline_mode = #tpu.pipeline_mode<synchronous>, transform_indices = @transform_5, window_bounds = array<i64: 128, 4>}, {transform_indices = @transform_6, window_bounds = array<i64: 1>}, {transform_indices = @transform_7, window_bounds = array<i64: 8, 4>}]} {
    %c0 = arith.constant 0 : index
    %c0_0 = arith.constant 0 : index
    %0 = vector.load %arg1[%c0, %c0_0] : memref<8x128xf32, #tpu.memory_space<vmem>>, vector<8x128xf32>
    %c0_1 = arith.constant 0 : index
    %c0_2 = arith.constant 0 : index
    %1 = vector.load %arg2[%c0_1, %c0_2] : memref<128x128xf32, #tpu.memory_space<vmem>>, vector<128x128xf32>
    %cst = arith.constant dense<0.000000e+00> : vector<8x128xf32>
    %2 = tpu.matmul %0, %1, %cst {dimension_numbers = #tpu.dot_dimension_numbers<[1], [0], [0], [1], [0, 0, 1, 1], [], []>} : vector<8x128xf32>, vector<128x128xf32>, vector<8x128xf32> -> vector<8x128xf32>
    %c0_3 = arith.constant 0 : index
    %c0_4 = arith.constant 0 : index
    %3 = vector.load %arg3[%c0_3, %c0_4] : memref<1x128xf32, #tpu.memory_space<vmem>>, vector<1x128xf32>
    %4 = vector.broadcast %3 : vector<1x128xf32> to vector<8x128xf32>
    %5 = arith.addf %2, %4 : vector<8x128xf32>
    %cst_5 = arith.constant 0.000000e+00 : f32
    %6 = vector.broadcast %cst_5 : f32 to vector<8x128xf32>
    %7 = arith.maximumf %5, %6 : vector<8x128xf32>
    %c0_6 = arith.constant 0 : index
    %c0_7 = arith.constant 0 : index
    %c0_8 = arith.constant 0 : index
    %8 = vector.load %arg4[%c0_6, %c0_7, %c0_8] : memref<2x128x128xf32, #tpu.memory_space<vmem>>, vector<1x128x128xf32>
    %9 = vector.shape_cast %8 : vector<1x128x128xf32> to vector<128x128xf32>
    %cst_9 = arith.constant dense<0.000000e+00> : vector<8x128xf32>
    %10 = tpu.matmul %7, %9, %cst_9 {dimension_numbers = #tpu.dot_dimension_numbers<[1], [0], [0], [1], [0, 0, 1, 1], [], []>} : vector<8x128xf32>, vector<128x128xf32>, vector<8x128xf32> -> vector<8x128xf32>
    %c0_10 = arith.constant 0 : index
    %c0_11 = arith.constant 0 : index
    %c0_12 = arith.constant 0 : index
    %11 = vector.load %arg5[%c0_10, %c0_11, %c0_12] : memref<2x1x128xf32, #tpu.memory_space<vmem>>, vector<1x1x128xf32>
    %12 = vector.shape_cast %11 : vector<1x1x128xf32> to vector<1x128xf32>
    %13 = vector.broadcast %12 : vector<1x128xf32> to vector<8x128xf32>
    %14 = arith.addf %10, %13 : vector<8x128xf32>
    %cst_13 = arith.constant 0.000000e+00 : f32
    %15 = vector.broadcast %cst_13 : f32 to vector<8x128xf32>
    %16 = arith.maximumf %14, %15 : vector<8x128xf32>
    %c1 = arith.constant 1 : index
    %c0_14 = arith.constant 0 : index
    %c0_15 = arith.constant 0 : index
    %17 = vector.load %arg4[%c1, %c0_14, %c0_15] : memref<2x128x128xf32, #tpu.memory_space<vmem>>, vector<1x128x128xf32>
    %18 = vector.shape_cast %17 : vector<1x128x128xf32> to vector<128x128xf32>
    %cst_16 = arith.constant dense<0.000000e+00> : vector<8x128xf32>
    %19 = tpu.matmul %16, %18, %cst_16 {dimension_numbers = #tpu.dot_dimension_numbers<[1], [0], [0], [1], [0, 0, 1, 1], [], []>} : vector<8x128xf32>, vector<128x128xf32>, vector<8x128xf32> -> vector<8x128xf32>
    %c1_17 = arith.constant 1 : index
    %c0_18 = arith.constant 0 : index
    %c0_19 = arith.constant 0 : index
    %20 = vector.load %arg5[%c1_17, %c0_18, %c0_19] : memref<2x1x128xf32, #tpu.memory_space<vmem>>, vector<1x1x128xf32>
    %21 = vector.shape_cast %20 : vector<1x1x128xf32> to vector<1x128xf32>
    %22 = vector.broadcast %21 : vector<1x128xf32> to vector<8x128xf32>
    %23 = arith.addf %19, %22 : vector<8x128xf32>
    %cst_20 = arith.constant 0.000000e+00 : f32
    %24 = vector.broadcast %cst_20 : f32 to vector<8x128xf32>
    %25 = arith.maximumf %23, %24 : vector<8x128xf32>
    %c0_21 = arith.constant 0 : index
    %c0_22 = arith.constant 0 : index
    %26 = vector.load %arg6[%c0_21, %c0_22] : memref<128x4xf32, #tpu.memory_space<vmem>>, vector<128x4xf32>
    %cst_23 = arith.constant dense<0.000000e+00> : vector<8x4xf32>
    %27 = tpu.matmul %25, %26, %cst_23 {dimension_numbers = #tpu.dot_dimension_numbers<[1], [0], [0], [1], [0, 0, 1, 1], [], []>} : vector<8x128xf32>, vector<128x4xf32>, vector<8x4xf32> -> vector<8x4xf32>
    %c0_24 = arith.constant 0 : index
    %28 = memref.load %arg7[%c0_24] : memref<1xf32, #tpu.memory_space<smem>>
    %29 = vector.broadcast %28 : f32 to vector<8x4xf32>
    %30 = arith.addf %27, %29 : vector<8x4xf32>
    %c0_25 = arith.constant 0 : index
    %c0_26 = arith.constant 0 : index
    %31 = vector.load %arg8[%c0_25, %c0_26] : memref<8x4xf32, #tpu.memory_space<vmem>>, vector<8x4xf32>
    tpu.vector_store %arg8[%c0_25, %c0_26], %30 {strides = array<i32>} : memref<8x4xf32, #tpu.memory_space<vmem>>, vector<8x4xf32>,
    return
  }
  func.func @transform_0(%arg0: i32) -> (i32, i32) {
    %c0_i32 = arith.constant 0 : i32
    %c0_i32_0 = arith.constant 0 : i32
    return %arg0, %c0_i32 : i32, i32
  }
  func.func @transform_1(%arg0: i32) -> (i32, i32) {
    %c0_i32 = arith.constant 0 : i32
    %c0_i32_0 = arith.constant 0 : i32
    %c0_i32_1 = arith.constant 0 : i32
    return %c0_i32, %c0_i32_0 : i32, i32
  }
  func.func @transform_2(%arg0: i32) -> (i32, i32) {
    %c0_i32 = arith.constant 0 : i32
    %c0_i32_0 = arith.constant 0 : i32
    %c0_i32_1 = arith.constant 0 : i32
    return %c0_i32, %c0_i32_0 : i32, i32
  }
  func.func @transform_3(%arg0: i32) -> (i32, i32, i32) {
    %c0_i32 = arith.constant 0 : i32
    %c0_i32_0 = arith.constant 0 : i32
    %c0_i32_1 = arith.constant 0 : i32
    %c0_i32_2 = arith.constant 0 : i32
    return %c0_i32, %c0_i32_0, %c0_i32_1 : i32, i32, i32
  }
  func.func @transform_4(%arg0: i32) -> (i32, i32, i32) {
    %c0_i32 = arith.constant 0 : i32
    %c0_i32_0 = arith.constant 0 : i32
    %c0_i32_1 = arith.constant 0 : i32
    %c0_i32_2 = arith.constant 0 : i32
    return %c0_i32, %c0_i32_0, %c0_i32_1 : i32, i32, i32
  }
  func.func @transform_5(%arg0: i32) -> (i32, i32) {
    %c0_i32 = arith.constant 0 : i32
    %c0_i32_0 = arith.constant 0 : i32
    %c0_i32_1 = arith.constant 0 : i32
    return %c0_i32, %c0_i32_0 : i32, i32
  }
  func.func @transform_6(%arg0: i32) -> i32 {
    %c0_i32 = arith.constant 0 : i32
    %c0_i32_0 = arith.constant 0 : i32
    return %c0_i32 : i32
  }
  func.func @transform_7(%arg0: i32) -> (i32, i32) {
    %c0_i32 = arith.constant 0 : i32
    %c0_i32_0 = arith.constant 0 : i32
    return %arg0, %c0_i32 : i32, i32
  }
}

</mosaic_0001>

<llo_original>
// kernel: mul.42
$region0: #{mul.42}
  #allocation0 [shape = 's32[1]{0}', space=sflag, size = 0x4, scoped, tag = 'scoped memory for mul.42']
  %s0 = inlined_call_operand.vmem [shape: f32[128,128], index: 0, kind: input, shape index: {}]
  %s1 = inlined_call_operand.vmem [shape: f32[128,128], index: 1, kind: input, shape index: {}]
  %s2 = inlined_call_operand.vmem [shape: f32[128,128], index: 2, kind: output, shape index: {}]
  %v3 = vld [vmem:[%s0] sm:$0xff]
  %v4 = vld [vmem:[%s1] sm:$0xff]
  %5 = xla_tuple %v3, %v4
  %6 = xla_tuple %5
  %v7 = vmul.f32 %v3, %v4
  %8 = xla_tuple %v7
  %9 = vst [vmem:[%s2] sm:$0xff] %v7
  %s10 = scalar_lea.vmem %s0, 8
  %v11 = vld [vmem:[%s10] sm:$0xff]
  %s12 = scalar_lea.vmem %s1, 8
  %v13 = vld [vmem:[%s12] sm:$0xff]
  %14 = xla_tuple %v11, %v13
  %15 = xla_tuple %14
  %v16 = vmul.f32 %v11, %v13
  %17 = xla_tuple %v16
  %s18 = scalar_lea.vmem %s2, 8
  %19 = vst [vmem:[%s18] sm:$0xff] %v16
  %s20 = scalar_lea.vmem %s0, 16
  %v21 = vld [vmem:[%s20] sm:$0xff]
  %s22 = scalar_lea.vmem %s1, 16
  %v23 = vld [vmem:[%s22] sm:$0xff]
  %24 = xla_tuple %v21, %v23
  %25 = xla_tuple %24
  %v26 = vmul.f32 %v21, %v23
  %27 = xla_tuple %v26
  %s28 = scalar_lea.vmem %s2, 16
  %29 = vst [vmem:[%s28] sm:$0xff] %v26
  %s30 = scalar_lea.vmem %s0, 24
  %v31 = vld [vmem:[%s30] sm:$0xff]
  %s32 = scalar_lea.vmem %s1, 24
  %v33 = vld [vmem:[%s32] sm:$0xff]
  %34 = xla_tuple %v31, %v33
  %35 = xla_tuple %34
  %v36 = vmul.f32 %v31, %v33
  %37 = xla_tuple %v36
  %s38 = scalar_lea.vmem %s2, 24
  %39 = vst [vmem:[%s38] sm:$0xff] %v36
  %s40 = scalar_lea.vmem %s0, 32
  %v41 = vld [vmem:[%s40] sm:$0xff]
  %s42 = scalar_lea.vmem %s1, 32
  %v43 = vld [vmem:[%s42] sm:$0xff]
  %44 = xla_tuple %v41, %v43
  %45 = xla_tuple %44
  %v46 = vmul.f32 %v41, %v43
  %47 = xla_tuple %v46
  %s48 = scalar_lea.vmem %s2, 32
  %49 = vst [vmem:[%s48] sm:$0xff] %v46
  %s50 = scalar_lea.vmem %s0, 40
  %v51 = vld [vmem:[%s50] sm:$0xff]
  %s52 = scalar_lea.vmem %s1, 40
  %v53 = vld [vmem:[%s52] sm:$0xff]
  %54 = xla_tuple %v51, %v53
  %55 = xla_tuple %54
  %v56 = vmul.f32 %v51, %v53
  %57 = xla_tuple %v56
  %s58 = scalar_lea.vmem %s2, 40
  %59 = vst [vmem:[%s58] sm:$0xff] %v56
  %s60 = scalar_lea.vmem %s0, 48
  %v61 = vld [vmem:[%s60] sm:$0xff]
  %s62 = scalar_lea.vmem %s1, 48
  %v63 = vld [vmem:[%s62] sm:$0xff]
  %64 = xla_tuple %v61, %v63
  %65 = xla_tuple %64
  %v66 = vmul.f32 %v61, %v63
  %67 = xla_tuple %v66
  %s68 = scalar_lea.vmem %s2, 48
  %69 = vst [vmem:[%s68] sm:$0xff] %v66
  %s70 = scalar_lea.vmem %s0, 56
  %v71 = vld [vmem:[%s70] sm:$0xff]
  %s72 = scalar_lea.vmem %s1, 56
  %v73 = vld [vmem:[%s72] sm:$0xff]
  %74 = xla_tuple %v71, %v73
  %75 = xla_tuple %74
  %v76 = vmul.f32 %v71, %v73
  %77 = xla_tuple %v76
  %s78 = scalar_lea.vmem %s2, 56
  %79 = vst [vmem:[%s78] sm:$0xff] %v76
  %s80 = scalar_lea.vmem %s0, 64
  %v81 = vld [vmem:[%s80] sm:$0xff]
  %s82 = scalar_lea.vmem %s1, 64
  %v83 = vld [vmem:[%s82] sm:$0xff]
  %84 = xla_tuple %v81, %v83
  %85 = xla_tuple %84
  %v86 = vmul.f32 %v81, %v83
  %87 = xla_tuple %v86
  %s88 = scalar_lea.vmem %s2, 64
  %89 = vst [vmem:[%s88] sm:$0xff] %v86
  %s90 = scalar_lea.vmem %s0, 72
  %v91 = vld [vmem:[%s90] sm:$0xff]
  %s92 = scalar_lea.vmem %s1, 72
  %v93 = vld [vmem:[%s92] sm:$0xff]
  %94 = xla_tuple %v91, %v93
  %95 = xla_tuple %94
  %v96 = vmul.f32 %v91, %v93
  %97 = xla_tuple %v96
  %s98 = scalar_lea.vmem %s2, 72
  %99 = vst [vmem:[%s98] sm:$0xff] %v96
  %s100 = scalar_lea.vmem %s0, 80
  %v101 = vld [vmem:[%s100] sm:$0xff]
  %s102 = scalar_lea.vmem %s1, 80
  %v103 = vld [vmem:[%s102] sm:$0xff]
  %104 = xla_tuple %v101, %v103
  %105 = xla_tuple %104
  %v106 = vmul.f32 %v101, %v103
  %107 = xla_tuple %v106
  %s108 = scalar_lea.vmem %s2, 80
  %109 = vst [vmem:[%s108] sm:$0xff] %v106
  %s110 = scalar_lea.vmem %s0, 88
  %v111 = vld [vmem:[%s110] sm:$0xff]
  %s112 = scalar_lea.vmem %s1, 88
  %v113 = vld [vmem:[%s112] sm:$0xff]
  %114 = xla_tuple %v111, %v113
  %115 = xla_tuple %114
  %v116 = vmul.f32 %v111, %v113
  %117 = xla_tuple %v116
  %s118 = scalar_lea.vmem %s2, 88
  %119 = vst [vmem:[%s118] sm:$0xff] %v116
  %s120 = scalar_lea.vmem %s0, 96
  %v121 = vld [vmem:[%s120] sm:$0xff]
  %s122 = scalar_lea.vmem %s1, 96
  %v123 = vld [vmem:[%s122] sm:$0xff]
  %124 = xla_tuple %v121, %v123
  %125 = xla_tuple %124
  %v126 = vmul.f32 %v121, %v123
  %127 = xla_tuple %v126
  %s128 = scalar_lea.vmem %s2, 96
  %129 = vst [vmem:[%s128] sm:$0xff] %v126
  %s130 = scalar_lea.vmem %s0, 104
  %v131 = vld [vmem:[%s130] sm:$0xff]
  %s132 = scalar_lea.vmem %s1, 104
  %v133 = vld [vmem:[%s132] sm:$0xff]
  %134 = xla_tuple %v131, %v133
  %135 = xla_tuple %134
  %v136 = vmul.f32 %v131, %v133
  %137 = xla_tuple %v136
  %s138 = scalar_lea.vmem %s2, 104
  %139 = vst [vmem:[%s138] sm:$0xff] %v136
  %s140 = scalar_lea.vmem %s0, 112
  %v141 = vld [vmem:[%s140] sm:$0xff]
  %s142 = scalar_lea.vmem %s1, 112
  %v143 = vld [vmem:[%s142] sm:$0xff]
  %144 = xla_tuple %v141, %v143
  %145 = xla_tuple %144
  %v146 = vmul.f32 %v141, %v143
  %147 = xla_tuple %v146
  %s148 = scalar_lea.vmem %s2, 112
  %149 = vst [vmem:[%s148] sm:$0xff] %v146
  %s150 = scalar_lea.vmem %s0, 120
  %v151 = vld [vmem:[%s150] sm:$0xff]
  %s152 = scalar_lea.vmem %s1, 120
  %v153 = vld [vmem:[%s152] sm:$0xff]
  %154 = xla_tuple %v151, %v153
  %155 = xla_tuple %154
  %v156 = vmul.f32 %v151, %v153
  %157 = xla_tuple %v156
  %s158 = scalar_lea.vmem %s2, 120
  %159 = vst [vmem:[%s158] sm:$0xff] %v156

// kernel: soap_mlp_forward.1
$region0: #{soap_mlp_forward.1}
  #allocation0 [shape = 'u32[]', space=smem, size = 0x4, offset = 0x4, fixed_abs, tag = 'smem constant byte address 0x4 - core index']
  #allocation1 [shape = 'u32[72,128]{1,0:T(1,128)}', space=vmem, size = 0x9000, scoped, tag = 'internal scratch']
  #allocation2 [shape = 'f32[1]{0:T(128)S(6)}', space=smem, size = 0x200, scoped, tag = 'scoped memory for soap_mlp_forward.1']
  %s0 = inlined_call_operand.vmem [shape: f32[8,128], index: 0, kind: input, shape index: {}]
  %s1 = inlined_call_operand.vmem [shape: f32[128,128], index: 1, kind: input, shape index: {}]
  %s2 = inlined_call_operand.vmem [shape: f32[1,128], index: 2, kind: input, shape index: {}]
  %s3 = inlined_call_operand.vmem [shape: f32[2,128,128], index: 3, kind: input, shape index: {}]
  %s4 = inlined_call_operand.vmem [shape: f32[2,1,128], index: 4, kind: input, shape index: {}]
  %s5 = inlined_call_operand.vmem [shape: f32[128,4], index: 5, kind: input, shape index: {}]
  %s6 = inlined_call_operand.<no memory space> [shape: f32[1], index: 6, kind: input, shape index: {}]
  %s7 = inlined_call_operand.vmem [shape: f32[8,4], index: 7, kind: output, shape index: {}]
  %s8 = sld [smem:[#allocation0]]
  $region38: #{soap_mlp_forward.1} parent=0
    _
  %s10 = ssub.s32 1, %s8
  %s11 = scalar_select 0, %s10, %s8
  %12 = sst [smem:[#allocation2]] %s6
  // Predicated region
  $region2: #{soap_mlp_forward.1} parent=0 // pred_check
    _
  $region3: #{soap_mlp_forward.1} parent=0 // pred_check_branch
    %14 = sbr.rel (0) target = $region5
  $region4: #{soap_mlp_forward.1} parent=0 // pred_region
    _
  $region5: #{soap_mlp_forward.1} parent=0 // pred_fallthru
    _
  // Predicated region
  $region6: #{soap_mlp_forward.1} parent=0 // pred_check
    _
  $region7: #{soap_mlp_forward.1} parent=0 // pred_check_branch
    %16 = sbr.rel (0) target = $region9
  $region8: #{soap_mlp_forward.1} parent=0 // pred_region
    _
  $region9: #{soap_mlp_forward.1} parent=0 // pred_fallthru
    _
  // Predicated region
  $region10: #{soap_mlp_forward.1} parent=0 // pred_check
    _
  $region11: #{soap_mlp_forward.1} parent=0 // pred_check_branch
    %18 = sbr.rel (0) target = $region13
  $region12: #{soap_mlp_forward.1} parent=0 // pred_region
    _
  $region13: #{soap_mlp_forward.1} parent=0 // pred_fallthru
    _
  // Predicated region
  $region14: #{soap_mlp_forward.1} parent=0 // pred_check
    _
  $region15: #{soap_mlp_forward.1} parent=0 // pred_check_branch
    %20 = sbr.rel (0) target = $region17
  $region16: #{soap_mlp_forward.1} parent=0 // pred_region
    _
  $region17: #{soap_mlp_forward.1} parent=0 // pred_fallthru
    _
  // Predicated region
  $region18: #{soap_mlp_forward.1} parent=0 // pred_check
    _
  $region19: #{soap_mlp_forward.1} parent=0 // pred_check_branch
    %22 = sbr.rel (0) target = $region21
  $region20: #{soap_mlp_forward.1} parent=0 // pred_region
    _
  $region21: #{soap_mlp_forward.1} parent=0 // pred_fallthru
    _
  // Predicated region
  $region22: #{soap_mlp_forward.1} parent=0 // pred_check
    _
  $region23: #{soap_mlp_forward.1} parent=0 // pred_check_branch
    %24 = sbr.rel (0) target = $region25
  $region24: #{soap_mlp_forward.1} parent=0 // pred_region
    _
  $region25: #{soap_mlp_forward.1} parent=0 // pred_fallthru
    _
  // Predicated region
  $region26: #{soap_mlp_forward.1} parent=0 // pred_check
    _
  $region27: #{soap_mlp_forward.1} parent=0 // pred_check_branch
    %26 = sbr.rel (0) target = $region29
  $region28: #{soap_mlp_forward.1} parent=0 // pred_region
    _
  $region29: #{soap_mlp_forward.1} parent=0 // pred_fallthru
    _
  %v27 = vld [vmem:[%s0] sm:$0xff]
  %v28 = vld [vmem:[%s1] sm:$0xff]
  %v29 = vld [vmem:[%s1 + $0x8] sm:$0xff]
  %v30 = vld [vmem:[%s1 + $0x10] sm:$0xff]
  %v31 = vld [vmem:[%s1 + $0x18] sm:$0xff]
  %v32 = vld [vmem:[%s1 + $0x20] sm:$0xff]
  %v33 = vld [vmem:[%s1 + $0x28] sm:$0xff]
  %v34 = vld [vmem:[%s1 + $0x30] sm:$0xff]
  %v35 = vld [vmem:[%s1 + $0x38] sm:$0xff]
  %v36 = vld [vmem:[%s1 + $0x40] sm:$0xff]
  %v37 = vld [vmem:[%s1 + $0x48] sm:$0xff]
  %v38 = vld [vmem:[%s1 + $0x50] sm:$0xff]
  %v39 = vld [vmem:[%s1 + $0x58] sm:$0xff]
  %v40 = vld [vmem:[%s1 + $0x60] sm:$0xff]
  %v41 = vld [vmem:[%s1 + $0x68] sm:$0xff]
  %v42 = vld [vmem:[%s1 + $0x70] sm:$0xff]
  %v43 = vld [vmem:[%s1 + $0x78] sm:$0xff]
  %v44 = vld [vmem:[%s2] sm:$0x1]
  %v46 = vperm.slane %v44, 0
  %48 = vmatpush.msra.mxu0 %v43
  %49 = vmatpush.msra.mxu0 %v42
  %50 = vmatpush.msra.mxu0 %v41
  %51 = vmatpush.msra.mxu0 %v40
  %52 = vmatpush.msra.mxu0 %v39
  %53 = vmatpush.msra.mxu0 %v38
  %54 = vmatpush.msra.mxu0 %v37
  %55 = vmatpush.msra.mxu0 %v36
  %56 = vmatpush.msra.mxu0 %v35
  %57 = vmatpush.msra.mxu0 %v34
  %58 = vmatpush.msra.mxu0 %v33
  %59 = vmatpush.msra.mxu0 %v32
  %60 = vmatpush.msra.mxu0 %v31
  %61 = vmatpush.msra.mxu0 %v30
  %62 = vmatpush.msra.mxu0 %v29
  %63 = vmatpush.msra.mxu0 %v28
  %64 = vmatmul.f32.gmra.mxu0 %v27
  %v65 = vpop.f32.mrf.mxu0
  %v66 = vadd.f32 %v46, %v65
  %67 = vdwg.mxu0
  %v68 = vmax.f32 %v66, 0.0
  %v69 = vld [vmem:[%s3] sm:$0xff]
  %v70 = vld [vmem:[%s3 + $0x8] sm:$0xff]
  %v71 = vld [vmem:[%s3 + $0x10] sm:$0xff]
  %v72 = vld [vmem:[%s3 + $0x18] sm:$0xff]
  %v73 = vld [vmem:[%s3 + $0x20] sm:$0xff]
  %v74 = vld [vmem:[%s3 + $0x28] sm:$0xff]
  %v75 = vld [vmem:[%s3 + $0x30] sm:$0xff]
  %v76 = vld [vmem:[%s3 + $0x38] sm:$0xff]
  %v77 = vld [vmem:[%s3 + $0x40] sm:$0xff]
  %v78 = vld [vmem:[%s3 + $0x48] sm:$0xff]
  %v79 = vld [vmem:[%s3 + $0x50] sm:$0xff]
  %v80 = vld [vmem:[%s3 + $0x58] sm:$0xff]
  %v81 = vld [vmem:[%s3 + $0x60] sm:$0xff]
  %v82 = vld [vmem:[%s3 + $0x68] sm:$0xff]
  %v83 = vld [vmem:[%s3 + $0x70] sm:$0xff]
  %v84 = vld [vmem:[%s3 + $0x78] sm:$0xff]
  %v85 = vld [vmem:[%s4] sm:$0x1]
  %v87 = vperm.slane %v85, 0
  %89 = vmatpush.msra.mxu0 %v84
  %90 = vmatpush.msra.mxu0 %v83
  %91 = vmatpush.msra.mxu0 %v82
  %92 = vmatpush.msra.mxu0 %v81
  %93 = vmatpush.msra.mxu0 %v80
  %94 = vmatpush.msra.mxu0 %v79
  %95 = vmatpush.msra.mxu0 %v78
  %96 = vmatpush.msra.mxu0 %v77
  %97 = vmatpush.msra.mxu0 %v76
  %98 = vmatpush.msra.mxu0 %v75
  %99 = vmatpush.msra.mxu0 %v74
  %100 = vmatpush.msra.mxu0 %v73
  %101 = vmatpush.msra.mxu0 %v72
  %102 = vmatpush.msra.mxu0 %v71
  %103 = vmatpush.msra.mxu0 %v70
  %104 = vmatpush.msra.mxu0 %v69
  %105 = vmatmul.f32.gmra.mxu0 %v68
  %v106 = vpop.f32.mrf.mxu0
  %v107 = vadd.f32 %v87, %v106
  %108 = vdwg.mxu0
  %v109 = vmax.f32 %v107, 0.0
  %s110 = scalar_lea.vmem %s3, 128
  %v111 = vld [vmem:[%s110] sm:$0xff]
  %v112 = vld [vmem:[%s110 + $0x8] sm:$0xff]
  %v113 = vld [vmem:[%s110 + $0x10] sm:$0xff]
  %v114 = vld [vmem:[%s110 + $0x18] sm:$0xff]
  %v115 = vld [vmem:[%s110 + $0x20] sm:$0xff]
  %v116 = vld [vmem:[%s110 + $0x28] sm:$0xff]
  %v117 = vld [vmem:[%s110 + $0x30] sm:$0xff]
  %v118 = vld [vmem:[%s110 + $0x38] sm:$0xff]
  %v119 = vld [vmem:[%s110 + $0x40] sm:$0xff]
  %v120 = vld [vmem:[%s110 + $0x48] sm:$0xff]
  %v121 = vld [vmem:[%s110 + $0x50] sm:$0xff]
  %v122 = vld [vmem:[%s110 + $0x58] sm:$0xff]
  %v123 = vld [vmem:[%s110 + $0x60] sm:$0xff]
  %v124 = vld [vmem:[%s110 + $0x68] sm:$0xff]
  %v125 = vld [vmem:[%s110 + $0x70] sm:$0xff]
  %v126 = vld [vmem:[%s110 + $0x78] sm:$0xff]
  %s127 = scalar_lea.vmem %s4, 1
  %v128 = vld [vmem:[%s127] sm:$0x1]
  %v130 = vperm.slane %v128, 0
  %132 = vmatpush.msra.mxu0 %v126
  %133 = vmatpush.msra.mxu0 %v125
  %134 = vmatpush.msra.mxu0 %v124
  %135 = vmatpush.msra.mxu0 %v123
  %136 = vmatpush.msra.mxu0 %v122
  %137 = vmatpush.msra.mxu0 %v121
  %138 = vmatpush.msra.mxu0 %v120
  %139 = vmatpush.msra.mxu0 %v119
  %140 = vmatpush.msra.mxu0 %v118
  %141 = vmatpush.msra.mxu0 %v117
  %142 = vmatpush.msra.mxu0 %v116
  %143 = vmatpush.msra.mxu0 %v115
  %144 = vmatpush.msra.mxu0 %v114
  %145 = vmatpush.msra.mxu0 %v113
  %146 = vmatpush.msra.mxu0 %v112
  %147 = vmatpush.msra.mxu0 %v111
  %148 = vmatmul.f32.gmra.mxu0 %v109
  %v149 = vpop.f32.mrf.mxu0
  %v150 = vadd.f32 %v130, %v149
  %151 = vdwg.mxu0
  %v152 = vmax.f32 %v150, 0.0
  %v153 = vld [vmem:[%s5] sm:$0xff]
  %v154 = vld [vmem:[%s5 + $0x8] sm:$0xff]
  %v155 = vld [vmem:[%s5 + $0x10] sm:$0xff]
  %v156 = vld [vmem:[%s5 + $0x18] sm:$0xff]
  %v157 = vld [vmem:[%s5 + $0x20] sm:$0xff]
  %v158 = vld [vmem:[%s5 + $0x28] sm:$0xff]
  %v159 = vld [vmem:[%s5 + $0x30] sm:$0xff]
  %v160 = vld [vmem:[%s5 + $0x38] sm:$0xff]
  %v161 = vld [vmem:[%s5 + $0x40] sm:$0xff]
  %v162 = vld [vmem:[%s5 + $0x48] sm:$0xff]
  %v163 = vld [vmem:[%s5 + $0x50] sm:$0xff]
  %v164 = vld [vmem:[%s5 + $0x58] sm:$0xff]
  %v165 = vld [vmem:[%s5 + $0x60] sm:$0xff]
  %v166 = vld [vmem:[%s5 + $0x68] sm:$0xff]
  %v167 = vld [vmem:[%s5 + $0x70] sm:$0xff]
  %v168 = vld [vmem:[%s5 + $0x78] sm:$0xff]
  %s169 = sld [smem:[#allocation2]]
  %v170 = vstv %s169
  %171 = vmatpush.msra.mxu0 %v168
  %172 = vmatpush.msra.mxu0 %v167
  %173 = vmatpush.msra.mxu0 %v166
  %174 = vmatpush.msra.mxu0 %v165
  %175 = vmatpush.msra.mxu0 %v164
  %176 = vmatpush.msra.mxu0 %v163
  %177 = vmatpush.msra.mxu0 %v162
  %178 = vmatpush.msra.mxu0 %v161
  %179 = vmatpush.msra.mxu0 %v160
  %180 = vmatpush.msra.mxu0 %v159
  %181 = vmatpush.msra.mxu0 %v158
  %182 = vmatpush.msra.mxu0 %v157
  %183 = vmatpush.msra.mxu0 %v156
  %184 = vmatpush.msra.mxu0 %v155
  %185 = vmatpush.msra.mxu0 %v154
  %186 = vmatpush.msra.mxu0 %v153
  %187 = vmatmul.f32.gmra.mxu0 %v152
  %v188 = vpop.f32.mrf.mxu0
  %v189 = vadd.f32 %v170, %v188
  %190 = vdwg.mxu0
  %vm191 = vcmask 31744
  %192 = vst.msk [vmem:[%s7] sm:$0xff] %vm191, %v189
  // Predicated region
  $region30: #{soap_mlp_forward.1} parent=0 // pred_check
    _
  $region31: #{soap_mlp_forward.1} parent=0 // pred_check_branch
    %194 = sbr.rel (0) target = $region33
  $region32: #{soap_mlp_forward.1} parent=0 // pred_region
    _
  $region33: #{soap_mlp_forward.1} parent=0 // pred_fallthru
    _
  // Predicated region
  $region34: #{soap_mlp_forward.1} parent=0 // pred_check
    _
  $region35: #{soap_mlp_forward.1} parent=0 // pred_check_branch
    %196 = sbr.rel (0) target = $region37
  $region36: #{soap_mlp_forward.1} parent=0 // pred_region
    _
  $region37: #{soap_mlp_forward.1} parent=0 // pred_fallthru
    _

</llo_original>
